<compile_context>
chip_gen: v7x
topology: tpu7x:2x2x1
jax: 0.10.0
libtpu: 0.0.40
codegen_flags: <defaults>
</compile_context>

<pallas_src>
import functools

import numpy as np
import jax
import jax.numpy as jnp
from jax import lax
from jax.experimental import pallas as pl
from jax.experimental.pallas import tpu as pltpu


def _ceil_div(a, b):
    return -(-a // b)


def _compute_output_len(lengths, kernel_size, stride):
    # Mirrors compute_output_shape() for integer arrays.
    lengths = jnp.asarray(lengths, jnp.int32)
    out = _ceil_div(jnp.maximum(lengths - kernel_size, 0), stride) + 1
    return jnp.where(lengths == 0, 0, out).astype(jnp.int32)


def _masked_avg_pool_kernel(x_ref, mw_ref, o_ref, *, kernel_size, stride,
                            tsy, win, n_sy, sy_total, s_total):
    """One (batch-block, feature-tile) grid step.

    x_ref : (Bb, S_k, Dt)    input features
    mw_ref: (Bb, n_sy, win)  windowed 0/1 mask per output-row tile (f32)
    o_ref : (Bb, Sy, Dt)     pooled output

    Output-row tile t covers rows [ro, ro+tsy) with ro = min(t*tsy, Sy-tsy);
    they only depend on input columns [sc, sc+win) with
    sc = min(ro*stride, S_k-win).  Anything a clamp drops lies past the true
    sequence end (mask == 0 there), so it contributes nothing to sum or norm.
    """
    bb = x_ref.shape[0]

    def _tile(b, t):
        ro = jnp.minimum(t * tsy, sy_total - tsy)      # first output row of tile
        sc = jnp.minimum(ro * stride, s_total - win)   # first input column loaded
        delta = ro * stride - sc                       # band shift inside window
        # band[r, c] = 1 iff loaded column c feeds output row (ro + r);
        # regenerated per tile from iotas (negligible VPU work vs. the dot).
        r = lax.broadcasted_iota(jnp.int32, (tsy, win), 0)
        c = lax.broadcasted_iota(jnp.int32, (tsy, win), 1)
        lo = r * stride + delta
        band = ((c >= lo) & (c < lo + kernel_size)).astype(jnp.float32)
        # Fold the sequence mask into the band (values stay exactly 0/1), so x
        # is never elementwise-masked or upcast.
        wb = band * mw_ref[b, pl.ds(t, 1), :]                         # (tsy, win)
        # Valid-count normaliser.  Recomputed per feature tile: it is
        # O(tsy*win) next to the O(tsy*win*Dt) dot.  Exact reciprocal keeps
        # torch's "divide by max(count, 1)" semantics (empty windows -> 0).
        norm = jnp.sum(wb, axis=1, keepdims=True)                     # (tsy, 1)
        inv = pl.reciprocal(jnp.maximum(norm, 1.0), approx=False)
        # One MXU dot per tile, accumulating in f32.
        x_win = x_ref[b, pl.ds(sc, win), :]                           # (win, Dt)
        acc = jnp.dot(wb.astype(x_win.dtype), x_win,
                      preferred_element_type=jnp.float32)             # (tsy, Dt)
        o_ref[b, pl.ds(ro, tsy), :] = (acc * inv).astype(o_ref.dtype)

    def _batch_body(b, carry):
        def _sy_body(t, inner):
            _tile(b, t)
            return inner
        return lax.fori_loop(0, n_sy, _sy_body, carry)

    lax.fori_loop(0, bb, _batch_body, 0)


def masked_avg_pool1d(x, mask, kernel_size, stride, *, max_block_b=8,
                      window_target=256):
    """JAX/Pallas equivalent of MaskedAvgPool1d.forward.

    x: (B, S, D)   mask: (B, S) bool/0-1
    Returns (y, y_mask) with y: (B, Sy, D), y_mask: (B, Sy) bool.
    """
    if stride > kernel_size:
        raise ValueError("Stride must be less than or equal to kernel size")
    B, S, D = x.shape
    assert mask.shape == (B, S)
    itemsize = jnp.dtype(x.dtype).itemsize

    # --- output length / implicit right-padding, exactly as the torch module --
    if kernel_size > S:
        padding = kernel_size - S
    else:
        padding = (kernel_size - S - stride) % stride
    Sy = (S + padding - kernel_size) // stride + 1

    # --- output-row tile size / contraction window ----------------------------
    # Window width ~window_target keeps the contraction close to a multiple of
    # 128 while bounding the flop waste factor win/K; tsy is then shrunk so the
    # window fits inside the real sequence (=> no padding pass over x).
    if window_target > kernel_size:
        tsy = (window_target - kernel_size) // stride + 1
    else:
        tsy = 8
    tsy = max(1, min(tsy, 512, Sy))
    if tsy >= 8:
        tsy = (tsy // 8) * 8
    if tsy > 1 and (tsy - 1) * stride + kernel_size > S:
        tsy = max(1, min(tsy, (S - kernel_size) // stride + 1))
        if tsy >= 8:
            tsy = (tsy // 8) * 8
    n_sy = _ceil_div(Sy, tsy)
    win = (tsy - 1) * stride + kernel_size

    # Only when the pooling window itself is longer than the sequence do we
    # physically pad along S (torch's `padding = K - S` case; tiny inputs).
    S_k = max(S, win)
    x_k, mask_k = x, mask
    if S_k > S:
        x_k = jnp.pad(x, ((0, 0), (0, S_k - S), (0, 0)))
        mask_k = jnp.pad(mask, ((0, 0), (0, S_k - S)))

    # --- per-generation VMEM budgeting ----------------------------------------
    try:
        vmem_cap = int(getattr(pltpu.get_tpu_info(), "vmem_capacity_bytes", 0)) \
            or (64 << 20)
    except Exception:
        vmem_cap = 64 << 20
    # x-tile budget: ~8 MiB on 128-MiB-VMEM parts (v5e/v6e), ~4 MiB on v7x.
    budget_x = int(min(8 << 20, max(2 << 20, vmem_cap // 16)))

    # --- feature tile first: largest 128-multiple divisor of D in budget ------
    if D % 128 == 0:
        dt = 128
        for m in range(D // 128, 0, -1):
            cand = 128 * m
            if D % cand == 0 and S_k * cand * itemsize <= budget_x:
                dt = cand
                break
    else:
        # Non-128-aligned feature dim: single full-D block.  Padding D would
        # cost extra full HBM passes over x and y, which outweighs the
        # partial-lane store penalty for this memory-bound op.
        dt = D
    n_di = D // dt

    # --- batch block from S*Dt (not S*D); it must divide B exactly ------------
    bb_cap = max(1, budget_x // max(1, S_k * dt * itemsize))
    bb = 1
    for cand in range(min(max_block_b, B, bb_cap), 0, -1):
        if B % cand == 0:
            bb = cand
            break
    n_bi = B // bb

    # --- make sure both v7x TensorCores get work (>= 2 parallel grid steps) ---
    if n_bi * n_di == 1:
        if dt % 256 == 0:
            dt //= 2
            n_di = D // dt
        elif bb > 1:
            for cand in range(bb // 2, 0, -1):
                if B % cand == 0:
                    bb = cand
                    break
            n_bi = B // bb

    # --- windowed mask: (B, n_sy, win) f32, one row per output-row tile -------
    # Tiny O(B*S) gather; lets the kernel read the mask with aligned sublane
    # slices instead of dynamic lane slices.  Starts match the kernel's clamps.
    ro_np = np.minimum(np.arange(n_sy) * tsy, Sy - tsy)
    sc_np = np.minimum(ro_np * stride, S_k - win)
    cols = sc_np[:, None] + np.arange(win)[None, :]        # (n_sy, win) static
    mw = mask_k.astype(jnp.float32)[:, cols]               # (B, n_sy, win)

    # --- explicit scoped-VMEM limit (double-buffered tiles + headroom) --------
    bytes_x = bb * S_k * dt * itemsize
    bytes_o = bb * Sy * dt * itemsize
    bytes_mw = bb * n_sy * win * 4
    vmem_need = 2 * (bytes_x + bytes_o + bytes_mw) + (8 << 20)
    vmem_limit = int(min(max(vmem_need, 32 << 20), int(vmem_cap * 0.9)))

    kernel = functools.partial(
        _masked_avg_pool_kernel,
        kernel_size=kernel_size, stride=stride,
        tsy=tsy, win=win, n_sy=n_sy, sy_total=Sy, s_total=S_k)

    # TODO(synk): for extremely long sequences where a single (S, 128) slab no
    # longer fits the VMEM budget, add an S-axis grid split (pl.Element
    # windows) on top of the in-kernel Sy tiling.
    y = pl.pallas_call(
        kernel,
        out_shape=jax.ShapeDtypeStruct((B, Sy, D), x.dtype),
        grid=(n_bi, n_di),          # di innermost: the mask block stays resident
        in_specs=[
            pl.BlockSpec((bb, S_k, dt), lambda bi, di: (bi, 0, di)),   # x
            pl.BlockSpec((bb, n_sy, win), lambda bi, di: (bi, 0, 0)),  # windowed mask
        ],
        out_specs=pl.BlockSpec((bb, Sy, dt), lambda bi, di: (bi, 0, di)),
        compiler_params=pltpu.CompilerParams(
            dimension_semantics=("parallel", "parallel"),
            vmem_limit_bytes=vmem_limit),
    )(x_k, mw)

    # --- y_mask: trivial O(B*Sy) scalar arithmetic, as in the torch module ----
    lens = jnp.sum(mask.astype(jnp.int32), axis=-1)
    out_lens = _compute_output_len(lens, kernel_size, stride)
    y_mask = jnp.arange(Sy, dtype=jnp.int32)[None, :] < out_lens[:, None]
    return y, y_mask


def _reference(x, mask, kernel_size, stride):
    """Direct numpy transcription of MaskedAvgPool1d.forward."""
    B, S, D = x.shape
    if kernel_size > S:
        padding = kernel_size - S
    else:
        padding = (kernel_size - S - stride) % stride
    if padding:
        x = np.pad(x, ((0, 0), (0, padding), (0, 0)))
        mask = np.pad(mask, ((0, 0), (0, padding)))
    Sp = x.shape[1]
    Sy = (Sp - kernel_size) // stride + 1
    y = np.zeros((B, Sy, D), np.float32)
    for b in range(B):
        for j in range(Sy):
            wm = mask[b, j * stride:j * stride + kernel_size].astype(np.float32)
            wx = x[b, j * stride:j * stride + kernel_size].astype(np.float32)
            norm = wm.sum()
            norm = 1.0 if norm == 0 else norm
            y[b, j] = (wx * wm[:, None]).sum(0) / norm
    lens = mask.sum(-1)
    out_lens = np.where(lens == 0, 0,
                        -(-np.maximum(lens - kernel_size, 0) // stride) + 1)
    y_mask = np.arange(Sy)[None, :] < out_lens[:, None]
    return y, y_mask


if __name__ == "__main__":
    key = jax.random.PRNGKey(0)

    def _run_case(case_key, B, S, D, kernel_size, stride, seq_lens, holes=()):
        x = jax.random.normal(case_key, (B, S, D), dtype=jnp.float32)
        mask_np = np.arange(S)[None, :] < np.asarray(seq_lens)[:, None]
        for (b, s) in holes:
            mask_np[b, s] = False          # holes exercise the general masked path
        mask = jnp.asarray(mask_np)

        y, y_mask = masked_avg_pool1d(x, mask, kernel_size, stride)
        y = jax.block_until_ready(y)
        y_mask = jax.block_until_ready(y_mask)

        y_ref, y_mask_ref = _reference(np.asarray(x), mask_np, kernel_size, stride)
        assert y.shape == y_ref.shape, (y.shape, y_ref.shape)
        np.testing.assert_allclose(np.asarray(y), y_ref, rtol=1e-5, atol=1e-5)
        np.testing.assert_array_equal(np.asarray(y_mask), y_mask_ref)

    k1, k2 = jax.random.split(key)
    # Small case: single-ish output tile, clamped last window, batch grid split.
    _run_case(k1, B=2, S=16, D=128, kernel_size=3, stride=2,
              seq_lens=[16, 11], holes=[(0, 5)])
    # Multi-tile case: overlapping windows, clamped last tile, an empty
    # sequence, and a feature-dim grid split (D=256 -> two 128-wide tiles).
    _run_case(k2, B=3, S=50, D=256, kernel_size=4, stride=3,
              seq_lens=[50, 37, 0], holes=[(0, 7), (1, 13), (1, 14)])

    print("KERNEL_OK")
</pallas_src>

<mosaic_0001>
module attributes {stable_mosaic.version = 11 : i64} {
  func.func @_masked_avg_pool_kernel(%arg0: i32, %arg1: i32, %arg2: memref<1x16x128xf32, #tpu.memory_space<vmem>>, %arg3: memref<1x2x15xf32, #tpu.memory_space<vmem>>, %arg4: memref<1x8x128xf32, #tpu.memory_space<vmem>>) attributes {dimension_semantics = [#tpu.dimension_semantics<parallel>, #tpu.dimension_semantics<parallel>], iteration_bounds = array<i64: 2, 1>, scalar_prefetch = 0 : i64, scratch_operands = 0 : i64, tpu.core_type = #tpu.core_type<tc>, window_params = [{transform_indices = @transform_0, window_bounds = array<i64: 1, 16, 128>}, {transform_indices = @transform_1, window_bounds = array<i64: 1, 2, 15>}, {transform_indices = @transform_2, window_bounds = array<i64: 1, 8, 128>}]} {
    %c0_i32 = arith.constant 0 : i32
    %c0_i32_0 = arith.constant 0 : i32
    %c2_i32 = arith.constant 2 : i32
    %0 = arith.addi %c0_i32_0, %c2_i32 : i32
    %c1_i32 = arith.constant 1 : i32
    scf.for %arg5 = %c0_i32_0 to %0 step %c1_i32  : i32 {
      %c7_i32 = arith.constant 7 : i32
      %1 = arith.muli %arg5, %c7_i32 : i32
      %c1_i32_3 = arith.constant 1 : i32
      %2 = arith.minsi %1, %c1_i32_3 : i32
      %c2_i32_4 = arith.constant 2 : i32
      %3 = arith.muli %2, %c2_i32_4 : i32
      %c1_i32_5 = arith.constant 1 : i32
      %4 = arith.minsi %3, %c1_i32_5 : i32
      %c2_i32_6 = arith.constant 2 : i32
      %5 = arith.muli %2, %c2_i32_6 : i32
      %6 = arith.subi %5, %4 : i32
      %7 = tpu.iota {dimensions = array<i32: 0>} : vector<7x15xi32>
      %8 = tpu.iota {dimensions = array<i32: 1>} : vector<7x15xi32>
      %c2_i32_7 = arith.constant 2 : i32
      %9 = vector.broadcast %c2_i32_7 : i32 to vector<7x15xi32>
      %10 = arith.muli %7, %9 : vector<7x15xi32>
      %11 = vector.broadcast %6 : i32 to vector<7x15xi32>
      %12 = arith.addi %10, %11 : vector<7x15xi32>
      %13 = arith.cmpi sge, %8, %12 : vector<7x15xi32>
      %c3_i32 = arith.constant 3 : i32
      %14 = vector.broadcast %c3_i32 : i32 to vector<7x15xi32>
      %15 = arith.addi %12, %14 : vector<7x15xi32>
      %16 = arith.cmpi slt, %8, %15 : vector<7x15xi32>
      %17 = arith.andi %13, %16 : vector<7x15xi1>
      %18 = arith.extui %17 : vector<7x15xi1> to vector<7x15xi32>
      %19 = arith.sitofp %18 : vector<7x15xi32> to vector<7x15xf32>
      %20 = arith.index_cast %c0_i32 : i32 to index
      %21 = arith.index_cast %arg5 : i32 to index
      %c0 = arith.constant 0 : index
      %22 = vector.load %arg3[%20, %21, %c0] : memref<1x2x15xf32, #tpu.memory_space<vmem>>, vector<1x1x15xf32>
      %23 = vector.shape_cast %22 : vector<1x1x15xf32> to vector<1x15xf32>
      %24 = vector.broadcast %23 : vector<1x15xf32> to vector<7x15xf32>
      %25 = arith.mulf %19, %24 : vector<7x15xf32>
      %cst = arith.constant dense<0.000000e+00> : vector<7xf32>
      %26 = vector.multi_reduction <add>, %25, %cst [1] : vector<7x15xf32> to vector<7xf32>
      %27 = vector.shape_cast %26 : vector<7xf32> to vector<7x1xf32>
      %cst_8 = arith.constant 1.000000e+00 : f32
      %28 = vector.broadcast %cst_8 : f32 to vector<7x1xf32>
      %29 = arith.maximumf %27, %28 : vector<7x1xf32>
      %30 = tpu.reciprocal %29 : vector<7x1xf32> -> vector<7x1xf32>
      %31 = arith.index_cast %c0_i32 : i32 to index
      %32 = arith.index_cast %4 : i32 to index
      %c0_9 = arith.constant 0 : index
      %33 = vector.load %arg2[%31, %32, %c0_9] : memref<1x16x128xf32, #tpu.memory_space<vmem>>, vector<1x15x128xf32>
      %34 = vector.shape_cast %33 : vector<1x15x128xf32> to vector<15x128xf32>
      %cst_10 = arith.constant dense<0.000000e+00> : vector<7x128xf32>
      %35 = tpu.matmul %25, %34, %cst_10 {dimension_numbers = #tpu.dot_dimension_numbers<[1], [0], [0], [1], [0, 0, 1, 1], [], []>} : vector<7x15xf32>, vector<15x128xf32>, vector<7x128xf32> -> vector<7x128xf32>
      %36 = vector.broadcast %30 : vector<7x1xf32> to vector<7x128xf32>
      %37 = arith.mulf %35, %36 : vector<7x128xf32>
      %38 = arith.index_cast %c0_i32 : i32 to index
      %39 = arith.index_cast %2 : i32 to index
      %c0_11 = arith.constant 0 : index
      %40 = vector.load %arg4[%38, %39, %c0_11] : memref<1x8x128xf32, #tpu.memory_space<vmem>>, vector<1x7x128xf32>
      %41 = vector.shape_cast %40 : vector<1x7x128xf32> to vector<7x128xf32>
      %42 = vector.shape_cast %37 : vector<7x128xf32> to vector<1x7x128xf32>
      tpu.vector_store %arg4[%38, %39, %c0_11], %42 {strides = array<i32>} : memref<1x8x128xf32, #tpu.memory_space<vmem>>, vector<1x7x128xf32>,
    }
    %c2_i32_1 = arith.constant 2 : i32
    %c1_i32_2 = arith.constant 1 : i32
    return
  }
  func.func @transform_0(%arg0: i32, %arg1: i32) -> (i32, i32, i32) {
    %c0_i32 = arith.constant 0 : i32
    %c0_i32_0 = arith.constant 0 : i32
    return %arg0, %c0_i32, %arg1 : i32, i32, i32
  }
  func.func @transform_1(%arg0: i32, %arg1: i32) -> (i32, i32, i32) {
    %c0_i32 = arith.constant 0 : i32
    %c0_i32_0 = arith.constant 0 : i32
    %c0_i32_1 = arith.constant 0 : i32
    return %arg0, %c0_i32, %c0_i32_0 : i32, i32, i32
  }
  func.func @transform_2(%arg0: i32, %arg1: i32) -> (i32, i32, i32) {
    %c0_i32 = arith.constant 0 : i32
    %c0_i32_0 = arith.constant 0 : i32
    return %arg0, %c0_i32, %arg1 : i32, i32, i32
  }
}

</mosaic_0001>

<llo_original>
// kernel: tpu_custom_call.1
$region0: #{tpu_custom_call.1}
  #allocation0 [shape = 'u32[]', space=smem, size = 0x4, offset = 0x4, fixed_abs, tag = 'smem constant byte address 0x4 - core index']
  #allocation1 [shape = 'u32[144,128]{1,0:T(1,128)}', space=vmem, size = 0x12000, scoped, tag = 'internal scratch']
  %s0 = inlined_call_operand.hbm [shape: f32[2,16,128], index: 0, kind: input, shape index: {}]
  %s1 = inlined_call_operand.hbm [shape: f32[2,2,15], index: 1, kind: input, shape index: {}]
  %s2 = inlined_call_operand.hbm [shape: f32[2,8,128], index: 2, kind: output, shape index: {}]
  %s3 = sld [smem:[#allocation0]]
  $region56: #{tpu_custom_call.1} parent=0
    _
  %s5 = ssub.s32 1, %s3
  %s6 = scalar_select 0, %s5, %s3
  $region1: #{tpu_custom_call.1} parent=0
    #allocation2 [shape = 'u8[16384]{0}', space=vmem, size = 0x4000, scoped, tag = 'input window, operand 0']
    #allocation3 [shape = 's32[2]{0}', space=sflag, size = 0x8, scoped, tag = 'scoped memory for tpu_custom_call.1']
    #allocation4 [shape = 's32[2]{0}', space=sflag, size = 0x8, scoped, tag = 'scoped memory for tpu_custom_call.1']
    #allocation5 [shape = 'u8[2048]{0}', space=vmem, size = 0x800, scoped, tag = 'input window, operand 1']
    #allocation6 [shape = 's32[2]{0}', space=sflag, size = 0x8, scoped, tag = 'scoped memory for tpu_custom_call.1']
    #allocation7 [shape = 'u8[8192]{0}', space=vmem, size = 0x2000, scoped, tag = 'output window, operand 0']
    %7 = vsyncpa [#allocation3], 0
    %s8 = scalar_lea.sflag [#allocation3], 1
    %9 = vsyncpa %s8, 0
    %10 = vsyncpa [#allocation6], 0
    %s11 = scalar_lea.sflag [#allocation6], 1
    %12 = vsyncpa %s11, 0
    %13 = vsyncpa [#allocation4], 0
    %s14 = scalar_lea.sflag [#allocation4], 1
    %15 = vsyncpa %s14, 0
    loop: start=0, step=1, limit=4
    $region2: #{tpu_custom_call.1} parent=1 // loop_pre_header
      _
    $region3: #{tpu_custom_call.1} parent=1 // loop_header
      %s17 = sphi 0, %s21
      %p18 = scmp.ge.s32.totalorder %s17, 4
      %s24 = sphi 0, %s36
      %s25 = sphi 0, %s32
      %s26 = sphi 0, %s24
      %s27 = sphi 0, %s25
      %s28 = sphi 0, %s26
      %s29 = sphi 0, %s27
      %s41 = sphi 0, %s43
      %s44 = sphi 0, %s41
      %s45 = sphi 0, %s44
      %s61 = sphi 0, %s45
      %s67 = sphi 0, %s69
      %s70 = sphi 0, %s67
      %s71 = sphi 0, %s70
      %s87 = sphi 0, %s71
      %s95 = sphi 0, %s97
      %s98 = sphi 0, %s95
      %s99 = sphi 0, %s98
      %s115 = sphi 0, %s99
    $region4: #{tpu_custom_call.1} parent=1 // loop_header_branch
      %20 = sbr.rel (%p18) target = $region8
    $region5: #{tpu_custom_call.1} parent=1 // loop_body
      %s22 = ssub.s32 %s17, 1
      %s23 = ssub.s32 %s17, 2
      %s30 = sadd.s32 1, %s25
      %p31 = scmp.ge.s32.totalorder %s30, 1
      %s32 = scalar_select %p31, 0, %s30
      %s33 = sadd.s32 1, %s24
      %s34 = scalar_select %p31, %s33, %s24
      %p35 = scmp.ge.s32.totalorder %s34, 2
      %s36 = scalar_select %p35, 0, %s34
      %s37 = ssub.s32 %s24, %s36
      %s38 = ssub.s32 %s25, %s32
      %s39 = sor.u32 %s37, %s38
      %p40 = scmp.eq.s32.totalorder %s39, 0
      %s42 = sadd.s32 %s41, 1
      %s43 = scalar_select %p40, %s41, %s42
      %p46 = pneg %p40
      %p47 = scmp.eq.s32.totalorder %s17, 1
      %p48 = por %p46, %p47
      %p49 = scmp.ne.s32.totalorder %s41, %s44
      %p50 = scmp.eq.s32.totalorder %s17, 0
      %p51 = por %p49, %p50
      %p52 = scmp.ne.s32.totalorder %s41, %s44
      %p53 = scmp.eq.s32.totalorder %s22, 1
      %p54 = por %p52, %p53
      %p55 = scmp.ne.s32.totalorder %s44, %s45
      %p56 = scmp.eq.s32.totalorder %s22, 0
      %p57 = por %p55, %p56
      %p58 = scmp.ne.s32.totalorder %s44, %s45
      %p59 = scmp.eq.s32.totalorder %s23, 1
      %p60 = por %p58, %p59
      %p62 = scmp.ne.s32.totalorder %s45, %s61
      %p63 = scmp.eq.s32.totalorder %s23, 0
      %p64 = por %p62, %p63
      %s65 = ssub.s32 %s24, %s36
      %p66 = scmp.eq.s32.totalorder %s65, 0
      %s68 = sadd.s32 %s67, 1
      %s69 = scalar_select %p66, %s67, %s68
      %p72 = pneg %p66
      %p73 = scmp.eq.s32.totalorder %s17, 1
      %p74 = por %p72, %p73
      %p75 = scmp.ne.s32.totalorder %s67, %s70
      %p76 = scmp.eq.s32.totalorder %s17, 0
      %p77 = por %p75, %p76
      %p78 = scmp.ne.s32.totalorder %s67, %s70
      %p79 = scmp.eq.s32.totalorder %s22, 1
      %p80 = por %p78, %p79
      %p81 = scmp.ne.s32.totalorder %s70, %s71
      %p82 = scmp.eq.s32.totalorder %s22, 0
      %p83 = por %p81, %p82
      %p84 = scmp.ne.s32.totalorder %s70, %s71
      %p85 = scmp.eq.s32.totalorder %s23, 1
      %p86 = por %p84, %p85
      %p88 = scmp.ne.s32.totalorder %s71, %s87
      %p89 = scmp.eq.s32.totalorder %s23, 0
      %p90 = por %p88, %p89
      %s91 = ssub.s32 %s24, %s36
      %s92 = ssub.s32 %s25, %s32
      %s93 = sor.u32 %s91, %s92
      %p94 = scmp.eq.s32.totalorder %s93, 0
      %s96 = sadd.s32 %s95, 1
      %s97 = scalar_select %p94, %s95, %s96
      %p100 = pneg %p94
      %p101 = scmp.eq.s32.totalorder %s17, 1
      %p102 = por %p100, %p101
      %p103 = scmp.ne.s32.totalorder %s95, %s98
      %p104 = scmp.eq.s32.totalorder %s17, 0
      %p105 = por %p103, %p104
      %p106 = scmp.ne.s32.totalorder %s95, %s98
      %p107 = scmp.eq.s32.totalorder %s22, 1
      %p108 = por %p106, %p107
      %p109 = scmp.ne.s32.totalorder %s98, %s99
      %p110 = scmp.eq.s32.totalorder %s22, 0
      %p111 = por %p109, %p110
      %p112 = scmp.ne.s32.totalorder %s98, %s99
      %p113 = scmp.eq.s32.totalorder %s23, 1
      %p114 = por %p112, %p113
      %p116 = scmp.ne.s32.totalorder %s99, %s115
      %p117 = scmp.eq.s32.totalorder %s23, 0
      %p118 = por %p116, %p117
      %p119 = scmp.le.s32.totalorder 1, %s17
      %p120 = scmp.lt.s32.totalorder %s17, 3
      %p121 = pnand %p119, %p120
      %p122 = pneg %p121
      // Predicated region
      $region9: #{tpu_custom_call.1} parent=5 // pred_check
        _
      $region10: #{tpu_custom_call.1} parent=5 // pred_check_branch
        %124 = sbr.rel (%p121) target = $region12
      $region11: #{tpu_custom_call.1} parent=5 // pred_region
        %s125 = ssub.s32 %s17, 1
      $region12: #{tpu_custom_call.1} parent=5 // pred_fallthru
        _
      %p126 = scmp.lt.s32.totalorder %s17, 2
      // Predicated region
      $region13: #{tpu_custom_call.1} parent=5 // pred_check
        %p127 = pneg %p126
      $region14: #{tpu_custom_call.1} parent=5 // pred_check_branch
        %129 = sbr.rel (%p127) target = $region16
      $region15: #{tpu_custom_call.1} parent=5 // pred_region
        // Predicated region
        $region17: #{tpu_custom_call.1} parent=15 // pred_check
          %p130 = pneg %p51
        $region18: #{tpu_custom_call.1} parent=15 // pred_check_branch
          %132 = sbr.rel (%p130) target = $region20
        $region19: #{tpu_custom_call.1} parent=15 // pred_region
          %s133 = sand.u32 %s41, 1
          %s134 = scalar_lea.sflag [#allocation3], %s133
          %s135 = sand.u32 %s41, 1
          %s136 = smul.addr %s135, 16
          %s137 = scalar_lea.vmem [#allocation2], %s136
          %s139 = ssub.s32 256, 256
          %140 = vsyncadd %s134, %s139
          %s141 = smul.addr %s24, 2
          %s142 = sadd.s32 %s25, %s141
          %s143 = smul.addr %s142, 128
          %s144 = scalar_lea.hbm %s0, %s143
          %s145 = sshll.u32 %s137, 4
          %s146 = int_to_ptr.vmem [resolvable:$true] %s145
          %151 = dma.hbm_to_vmem [thread:$0]  %s144, 256, %s146, %s134, 128, 128, 8
        $region20: #{tpu_custom_call.1} parent=15 // pred_fallthru
          _
        // Predicated region
        $region21: #{tpu_custom_call.1} parent=15 // pred_check
          %p152 = pneg %p77
        $region22: #{tpu_custom_call.1} parent=15 // pred_check_branch
          %154 = sbr.rel (%p152) target = $region24
        $region23: #{tpu_custom_call.1} parent=15 // pred_region
          %s155 = sand.u32 %s67, 1
          %s156 = scalar_lea.sflag [#allocation6], %s155
          %s157 = sand.u32 %s67, 1
          %s158 = smul.addr %s157, 2
          %s159 = scalar_lea.vmem [#allocation5], %s158
          %s161 = ssub.s32 32, 32
          %162 = vsyncadd %s156, %s161
          %s163 = smul.addr %s24, 32
          %s164 = scalar_lea.hbm %s1, %s163
          %s166 = sshll.u32 %s159, 4
          %s167 = int_to_ptr.vmem [resolvable:$true] %s166
          %169 = dma.hbm_to_vmem [thread:$0]  %s164, 32, %s167, %s156
        $region24: #{tpu_custom_call.1} parent=15 // pred_fallthru
          _
      $region16: #{tpu_custom_call.1} parent=5 // pred_fallthru
        _
      %p170 = scmp.le.s32.totalorder 1, %s17
      %p171 = scmp.lt.s32.totalorder %s17, 3
      %p172 = pnand %p170, %p171
      %p173 = pneg %p172
      // Predicated region
      $region25: #{tpu_custom_call.1} parent=5 // pred_check
        _
      $region26: #{tpu_custom_call.1} parent=5 // pred_check_branch
        %175 = sbr.rel (%p172) target = $region28
      $region27: #{tpu_custom_call.1} parent=5 // pred_region
        %s176 = ssub.s32 %s17, 1
        %s177 = sand.u32 %s44, 1
        %s178 = scalar_lea.sflag [#allocation3], %s177
        %s179 = sand.u32 %s44, 1
        %s180 = smul.addr %s179, 16
        %s181 = scalar_lea.vmem [#allocation2], %s180
        // Predicated region
        $region29: #{tpu_custom_call.1} parent=27 // pred_check
          %p182 = pneg %p57
        $region30: #{tpu_custom_call.1} parent=27 // pred_check_branch
          %184 = sbr.rel (%p182) target = $region32
        $region31: #{tpu_custom_call.1} parent=27 // pred_region
          %185 = dma.done %s178, 256
        $region32: #{tpu_custom_call.1} parent=27 // pred_fallthru
          _
        %s186 = sand.u32 %s70, 1
        %s187 = scalar_lea.sflag [#allocation6], %s186
        %s188 = sand.u32 %s70, 1
        %s189 = smul.addr %s188, 2
        %s190 = scalar_lea.vmem [#allocation5], %s189
        // Predicated region
        $region33: #{tpu_custom_call.1} parent=27 // pred_check
          %p191 = pneg %p83
        $region34: #{tpu_custom_call.1} parent=27 // pred_check_branch
          %193 = sbr.rel (%p191) target = $region36
        $region35: #{tpu_custom_call.1} parent=27 // pred_region
          %194 = dma.done %s187, 32
        $region36: #{tpu_custom_call.1} parent=27 // pred_fallthru
          _
        %s195 = sand.u32 %s44, 1
        %s196 = scalar_lea.sflag [#allocation3], %s195
        %s197 = sand.u32 %s44, 1
        %s198 = smul.addr %s197, 16
        %s199 = scalar_lea.vmem [#allocation2], %s198
        %p200 = pneg %p57
        %p201 = pneg %p54
        %s202 = sand.u32 %s70, 1
        %s203 = scalar_lea.sflag [#allocation6], %s202
        %s204 = sand.u32 %s70, 1
        %s205 = smul.addr %s204, 2
        %s206 = scalar_lea.vmem [#allocation5], %s205
        %p207 = pneg %p83
        %p208 = pneg %p80
        %p209 = pneg %p111
        %p210 = pneg %p108
        %s211 = sand.u32 %s98, 1
        %s212 = scalar_lea.sflag [#allocation4], %s211
        %s213 = sand.u32 %s98, 1
        %s214 = smul.addr %s213, 8
        %s215 = scalar_lea.vmem [#allocation7], %s214
        loop: start=0, step=1, limit=2
        $region37: #{tpu_custom_call.1} parent=27 // loop_pre_header
          _
        $region38: #{tpu_custom_call.1} parent=27 // loop_header
          %s217 = sphi 0, %s221
          %p218 = scmp.ge.s32.totalorder %s217, 2
        $region39: #{tpu_custom_call.1} parent=27 // loop_header_branch
          %220 = sbr.rel (%p218) target = $region43
        $region40: #{tpu_custom_call.1} parent=27 // loop_body
          %s222 = smul.u32 %s217, 7
          %p223 = scmp.lt.s32.totalorder %s222, 1
          %s224 = scalar_select %p223, %s222, 1
          %s225 = smul.u32 %s224, 2
          %p226 = scmp.lt.s32.totalorder %s225, 1
          %s227 = scalar_select %p226, %s225, 1
          %s228 = ssub.s32 %s225, %s227
          %v229 = vlaneseq
          %v230 = vshrl.u32 %v229, 7
          %v231 = vlaneseq
          %v232 = vand.u32 %v231, 127
          %v233 = vmul.u32 %v230, 2
          %v234 = vstv %s228
          %v235 = vadd.s32 %v233, %v234
          %vm236 = vcmp.ge.s32.totalorder %v232, %v235
          %v237 = vadd.s32 %v235, 3
          %vm238 = vcmp.lt.s32.totalorder %v232, %v237
          %vm239 = vmand %vm236, %vm238
          %v240 = vsel %vm239, 1, 0
          %v241 = vcvt.s32.f32 %v240
          %s242 = scalar_lea.vmem %s190, %s217 [#allocation5]
          %v243 = vld [vmem:[%s242] sm:$0x1]
          %v244 = vlaneseq
          %v245 = vshrl.u32 %v244, 7
          %v246 = vsub.s32 0, %v245
          %v247 = vrot.slane %v243, %v246
          %v248 = vmul.f32 %v241, %v247
          %vm249 = vcmask 120832
          %v250 = vsel %vm249, %v248, 0.0
          %251 = vadd.xlane.f32.xlu0 %v250
          %v252 = vpop.xlane.xlu0 %251
          %v253 = vmax.f32 %v252, 1.0
          %v254 = vrcp.pop %v253
          %s255 = scalar_lea.vmem %s181, %s227 [#allocation2]
          %v256 = vld [vmem:[%s255] sm:$0xff]
          %v257 = vld [vmem:[%s255 + $0x8] sm:$0x7f]
          %vm258 = vcmask 121856
          %v260 = vsel %vm258, %v248, 0
          %vm262 = vcmask 1046528
          %v264 = vsel %vm262, %v257, 0
          %266 = vmatprep.subr.mxu0 0.0
          %267 = vmatpush1.msra.mxu0 %v256
          %268 = vmatprep.subr.mxu0 0.0
          %269 = vmatpush1.msra.mxu0 %v264
          %270 = vmatprep.subr.mxu0 0.0
          %271 = vmatpush1.msra.mxu0 0.0
          %272 = vmatprep.subr.mxu0 0.0
          %273 = vmatpush1.msra.mxu0 0.0
          %274 = vmatprep.subr.mxu0 0.0
          %275 = vmatpush1.msra.mxu0 0.0
          %276 = vmatprep.subr.mxu0 0.0
          %277 = vmatpush1.msra.mxu0 0.0
          %278 = vmatprep.subr.mxu0 0.0
          %279 = vmatpush1.msra.mxu0 0.0
          %280 = vmatprep.subr.mxu0 0.0
          %281 = vmatpush1.msra.mxu0 0.0
          %282 = vmatprep.subr.mxu0 0.0
          %283 = vmatpush1.msra.mxu0 0.0
          %284 = vmatprep.subr.mxu0 0.0
          %285 = vmatpush1.msra.mxu0 0.0
          %286 = vmatprep.subr.mxu0 0.0
          %287 = vmatpush1.msra.mxu0 0.0
          %288 = vmatprep.subr.mxu0 0.0
          %289 = vmatpush1.msra.mxu0 0.0
          %290 = vmatprep.subr.mxu0 0.0
          %291 = vmatpush1.msra.mxu0 0.0
          %292 = vmatprep.subr.mxu0 0.0
          %293 = vmatpush1.msra.mxu0 0.0
          %294 = vmatprep.subr.mxu0 0.0
          %295 = vmatpush1.msra.mxu0 0.0
          %296 = vmatprep.subr.mxu0 0.0
          %297 = vmatpush1.msra.mxu0 0.0
          %298 = vmatprep.subr.mxu0 0.0
          %299 = vmatpush1.msra.mxu0 0.0
          %300 = vmatprep.subr.mxu0 0.0
          %301 = vmatpush1.msra.mxu0 0.0
          %302 = vmatprep.subr.mxu0 0.0
          %303 = vmatpush1.msra.mxu0 0.0
          %304 = vmatprep.subr.mxu0 0.0
          %305 = vmatpush1.msra.mxu0 0.0
          %306 = vmatprep.subr.mxu0 0.0
          %307 = vmatpush1.msra.mxu0 0.0
          %308 = vmatprep.subr.mxu0 0.0
          %309 = vmatpush1.msra.mxu0 0.0
          %310 = vmatprep.subr.mxu0 0.0
          %311 = vmatpush1.msra.mxu0 0.0
          %312 = vmatprep.subr.mxu0 0.0
          %313 = vmatpush1.msra.mxu0 0.0
          %314 = vmatprep.subr.mxu0 0.0
          %315 = vmatpush1.msra.mxu0 0.0
          %316 = vmatprep.subr.mxu0 0.0
          %317 = vmatpush1.msra.mxu0 0.0
          %318 = vmatprep.subr.mxu0 0.0
          %319 = vmatpush1.msra.mxu0 0.0
          %320 = vmatprep.subr.mxu0 0.0
          %321 = vmatpush1.msra.mxu0 0.0
          %322 = vmatprep.subr.mxu0 0.0
          %323 = vmatpush1.msra.mxu0 0.0
          %324 = vmatprep.subr.mxu0 0.0
          %325 = vmatpush1.msra.mxu0 0.0
          %326 = vmatprep.subr.mxu0 0.0
          %327 = vmatpush1.msra.mxu0 0.0
          %328 = vmatprep.subr.mxu0 0.0
          %329 = vmatpush1.msra.mxu0 0.0
          %330 = vmatprep.mubr.f32.mxu0 0.0
          %331 = vmatmul.mubr.f32.gmra.mrb[0].mxu0 %v260
          %v332 = vpop.f32.mrb[0].mxu0
          %v333 = vadd.f32 0.0, %v332
          %v334 = vpop.f32.mrb[0].mxu0
          %335 = vdwg.mxu0
          %v336 = vmul.f32 %v333, %v254
          %s337 = scalar_lea.vmem %s215, %s224 [#allocation7]
          %338 = vst [vmem:[%s337] sm:$0x7f] %v336
        $region41: #{tpu_custom_call.1} parent=27 // loop_footer
          %s221 = sadd.s32 1, %s217
        $region42: #{tpu_custom_call.1} parent=27 // loop_footer_branch
          %216 = sbr.rel target = $region38
        $region43: #{tpu_custom_call.1} parent=27 // loop_exit
          _
        %s339 = sand.u32 %s98, 1
        %s340 = scalar_lea.sflag [#allocation4], %s339
        %s341 = sand.u32 %s98, 1
        %s342 = smul.addr %s341, 8
        %s343 = scalar_lea.vmem [#allocation7], %s342
        // Predicated region
        $region44: #{tpu_custom_call.1} parent=27 // pred_check
          %p344 = pneg %p108
        $region45: #{tpu_custom_call.1} parent=27 // pred_check_branch
          %346 = sbr.rel (%p344) target = $region47
        $region46: #{tpu_custom_call.1} parent=27 // pred_region
          %s348 = ssub.s32 128, 128
          %349 = vsyncadd %s340, %s348
          %s350 = sadd.s32 %s27, %s26
          %s351 = smul.addr %s350, 128
          %s352 = scalar_lea.hbm %s2, %s351
          %s354 = sshll.u32 %s343, 4
          %s355 = int_to_ptr.vmem [resolvable:$true] %s354
          %357 = dma.vmem_to_hbm [thread:$0]  %s355, 128, %s352, %s340
        $region47: #{tpu_custom_call.1} parent=27 // pred_fallthru
          _
      $region28: #{tpu_custom_call.1} parent=5 // pred_fallthru
        _
      %p358 = scmp.le.s32.totalorder 2, %s17
      // Predicated region
      $region48: #{tpu_custom_call.1} parent=5 // pred_check
        %p359 = pneg %p358
      $region49: #{tpu_custom_call.1} parent=5 // pred_check_branch
        %361 = sbr.rel (%p359) target = $region51
      $region50: #{tpu_custom_call.1} parent=5 // pred_region
        %s362 = ssub.s32 %s17, 2
        // Predicated region
        $region52: #{tpu_custom_call.1} parent=50 // pred_check
          %p363 = pneg %p114
        $region53: #{tpu_custom_call.1} parent=50 // pred_check_branch
          %365 = sbr.rel (%p363) target = $region55
        $region54: #{tpu_custom_call.1} parent=50 // pred_region
          %s366 = sand.u32 %s99, 1
          %s367 = scalar_lea.sflag [#allocation4], %s366
          %s368 = sand.u32 %s99, 1
          %s369 = smul.addr %s368, 8
          %s370 = scalar_lea.vmem [#allocation7], %s369
          %371 = dma.done %s367, 128
        $region55: #{tpu_custom_call.1} parent=50 // pred_fallthru
          _
      $region51: #{tpu_custom_call.1} parent=5 // pred_fallthru
        _
    $region6: #{tpu_custom_call.1} parent=1 // loop_footer
      %s21 = sadd.s32 1, %s17
    $region7: #{tpu_custom_call.1} parent=1 // loop_footer_branch
      %16 = sbr.rel target = $region3
    $region8: #{tpu_custom_call.1} parent=1 // loop_exit
      _
    %372 = vsyncpa [#allocation3], 1
    %s373 = scalar_lea.sflag [#allocation3], 1
    %374 = vsyncpa %s373, 1
    %375 = vsyncpa [#allocation6], 1
    %s376 = scalar_lea.sflag [#allocation6], 1
    %377 = vsyncpa %s376, 1
    %378 = vsyncpa [#allocation4], 1
    %s379 = scalar_lea.sflag [#allocation4], 1
    %380 = vsyncpa %s379, 1

</llo_original>
